<compile_context>
chip_gen: v7x
topology: tpu7x:2x2x1
jax: 0.10.0
libtpu: 0.0.40
codegen_flags: <defaults>
</compile_context>

<pallas_src>
import numpy as np

import jax
import jax.numpy as jnp
from jax.experimental import pallas as pl
from jax.experimental.pallas import tpu as pltpu


LANE = 128
SUBLANE_BF16 = 16          # bf16 packs 16 rows per vreg sublane tile


def _round_up(x, m):
    return ((x + m - 1) // m) * m


def _cdiv(a, b):
    return -(-a // b)


def _bf16_tanh_default():
    # bf16 EUP/VPU exist on v6e/v7x; keep f32 tanh elsewhere (v5e, v4, ...).
    try:
        kind = jax.devices()[0].device_kind.lower()
        return ("v6" in kind) or ("v7" in kind)
    except Exception:
        return False


# ----------------------------------------------------------------------------
# Fused Pallas kernel: n_hidden x (Linear + tanh) -> Linear
# (obs-normalization is folded into layer 0 at prepare time)
# ----------------------------------------------------------------------------
def _make_policy_kernel(n_hidden, bf16_tanh):
    def kernel(*refs):
        # refs: [x, w0, b0, ..., w_{n-1}, b_{n-1}, w_out, b_out, o]
        x_ref = refs[0]
        o_ref = refs[-1]
        p = refs[1:-1]

        h = x_ref[...]                              # bf16 [tm, D_in]

        for i in range(n_hidden):
            w = p[2 * i][...]                       # bf16 [K(_pad), N_pad]
            b = p[2 * i + 1][...]                   # f32  [1, N_pad]
            acc = jnp.dot(h, w, preferred_element_type=jnp.float32) + b
            if bf16_tanh:
                h = jnp.tanh(acc.astype(jnp.bfloat16))      # bf16 EUP
            else:
                h = jnp.tanh(acc).astype(jnp.bfloat16)      # f32 EUP (v5e)

        w = p[2 * n_hidden][...]
        b = p[2 * n_hidden + 1][...]
        out = jnp.dot(h, w, preferred_element_type=jnp.float32) + b
        o_ref[...] = out.astype(o_ref.dtype)        # bf16 lane-dense store

    return kernel


# ----------------------------------------------------------------------------
# Parameter preparation (mirrors LoadedGaussianPolicy.__init__ / _read_layer)
# ----------------------------------------------------------------------------
def _read_layer(l):
    assert list(l.keys()) == ["AffineLayer"]
    assert sorted(l["AffineLayer"].keys()) == ["W", "b"]
    return (l["AffineLayer"]["W"].astype(np.float32),
            l["AffineLayer"]["b"].astype(np.float32))


def prepare_policy(layer_params, out_layer_params, activation_func,
                   obsnorm_mean, obsnorm_stdev):
    if activation_func != "tanh":
        # TODO(synk): the reference 'lrelu' branch returns an nn.LeakyReLU
        # module instead of applying it (a bug in the original); only the
        # tanh path is lowered here.
        raise NotImplementedError(activation_func)

    # nn.Linear(height, width) with weight = W.T computes y = x @ W + b,
    # so W (in, out) is directly consumable as the matmul RHS.
    Ws, bs = [], []
    for name in sorted(layer_params.keys()):
        W, b = _read_layer(layer_params[name])
        Ws.append(W)
        bs.append(b.squeeze(0) if b.ndim == 2 else b)
    Wo, bo = _read_layer(out_layer_params)
    Ws.append(Wo)
    bs.append(bo.squeeze(0) if bo.ndim == 2 else bo)

    in_dim = Ws[0].shape[0]
    out_dim = Ws[-1].shape[1]

    # Fold obs-normalization into layer 0 (in f32, before any bf16 cast):
    #   y0 = ((x - mean) * invstd) @ W0 + b0 = x @ (diag(invstd) W0) + b0'
    mean = np.asarray(obsnorm_mean, np.float32).reshape(-1)
    std = np.asarray(obsnorm_stdev, np.float32).reshape(-1)
    invstd = 1.0 / (std + 1e-6)
    W0 = Ws[0] * invstd[:, None]
    b0 = bs[0] - (mean * invstd) @ Ws[0]
    Ws = [W0] + Ws[1:]
    bs = [b0] + bs[1:]

    # Lane-dense padding (128) of every feature dim EXCEPT the raw input dim
    # (x is passed at its real width; layer-0 weights keep K = in_dim rows).
    dims = [in_dim] + [W.shape[1] for W in Ws]
    pdims = [in_dim] + [_round_up(d, LANE) for d in dims[1:]]

    flat = []
    for i, (W, b) in enumerate(zip(Ws, bs)):
        Kp, Np = pdims[i], pdims[i + 1]
        Wp = np.zeros((Kp, Np), np.float32)
        Wp[: W.shape[0], : W.shape[1]] = W
        bp = np.zeros((1, Np), np.float32)
        bp[0, : b.shape[0]] = b
        flat.append(jnp.asarray(Wp, jnp.bfloat16))   # bf16 MXU operands
        flat.append(jnp.asarray(bp, jnp.float32))

    params = dict(flat=tuple(flat))
    meta = dict(in_dim=in_dim, out_dim=out_dim, pdims=pdims,
                n_hidden=len(Ws) - 1)
    return params, meta


# ----------------------------------------------------------------------------
# Forward pass (mirrors LoadedGaussianPolicy.forward)
# ----------------------------------------------------------------------------
def policy_forward(params, meta, x, tile_m=1024, bf16_tanh=None):
    B, D = x.shape
    assert D == meta["in_dim"]
    pdims = meta["pdims"]
    Dout_p = pdims[-1]
    n_hidden = meta["n_hidden"]
    if bf16_tanh is None:
        bf16_tanh = _bf16_tanh_default()

    # Batch padding / balanced tiling (bf16 -> 16-row sublane granularity).
    Mp0 = _round_up(max(B, SUBLANE_BF16), SUBLANE_BF16)
    n_tiles = _cdiv(Mp0, tile_m)
    if n_tiles == 1 and Mp0 >= 2 * SUBLANE_BF16:
        n_tiles = 2                       # keep both v7x TensorCores busy
    elif n_tiles > 1 and n_tiles % 2 == 1:
        n_tiles += 1                      # even step count balances 2 TCs
    tm = _round_up(_cdiv(Mp0, n_tiles), SUBLANE_BF16)
    Mp = n_tiles * tm

    # Only the batch axis is padded; x is pre-cast to bf16 (MXU LHS dtype).
    xp = jnp.zeros((Mp, D), jnp.bfloat16).at[:B, :].set(x.astype(jnp.bfloat16))

    flat = params["flat"]
    kernel = _make_policy_kernel(n_hidden, bf16_tanh)

    in_specs = [
        # x tile: last block dim == full array last dim (no 128-pad needed)
        pl.BlockSpec((tm, D), lambda i: (i, 0)),
    ]
    for j in range(0, len(flat), 2):
        # resident weights/biases: constant index_map, single-buffered
        in_specs.append(pl.BlockSpec(flat[j].shape, lambda i: (0, 0),
                                     pipeline_mode=pl.Buffered(1)))
        in_specs.append(pl.BlockSpec(flat[j + 1].shape, lambda i: (0, 0),
                                     pipeline_mode=pl.Buffered(1)))
    out_specs = pl.BlockSpec((tm, Dout_p), lambda i: (i, 0))

    # advisory cost hint for the XLA scheduler
    flops = 0
    trans = 0
    for li in range(n_hidden + 1):
        flops += 2 * Mp * pdims[li] * pdims[li + 1]
        if li < n_hidden:
            trans += Mp * pdims[li + 1]
    bytes_accessed = (xp.size * 2 + Mp * Dout_p * 2 +
                      sum(a.size * a.dtype.itemsize for a in flat))
    cost = pl.CostEstimate(flops=int(flops), transcendentals=int(trans),
                           bytes_accessed=int(bytes_accessed))

    out = pl.pallas_call(
        kernel,
        out_shape=jax.ShapeDtypeStruct((Mp, Dout_p), jnp.bfloat16),
        grid=(Mp // tm,),
        in_specs=in_specs,
        out_specs=out_specs,
        compiler_params=pltpu.CompilerParams(
            dimension_semantics=("parallel",),
            vmem_limit_bytes=32 * 1024 * 1024,
        ),
        cost_estimate=cost,
    )(xp, *flat)

    return out[:B, : meta["out_dim"]].astype(jnp.float32)


# ----------------------------------------------------------------------------
# Demo / self-test
# ----------------------------------------------------------------------------
if __name__ == "__main__":
    key = jax.random.PRNGKey(0)
    k_obs, k_mean, k_std, k0, k1, k2 = jax.random.split(key, 6)

    BATCH, OBS_DIM, HIDDEN, ACT_DIM = 2, 32, 64, 8

    def affine(k, fan_in, fan_out):
        kw, kb = jax.random.split(k)
        W = np.asarray(jax.random.normal(kw, (fan_in, fan_out), jnp.float32)
                       / np.sqrt(fan_in))
        b = np.asarray(0.01 * jax.random.normal(kb, (1, fan_out), jnp.float32))
        return {"AffineLayer": {"W": W, "b": b}}

    layer_params = {
        "layer_0": affine(k0, OBS_DIM, HIDDEN),
        "layer_1": affine(k1, HIDDEN, HIDDEN),
    }
    out_layer_params = affine(k2, HIDDEN, ACT_DIM)

    obsnorm_mean = np.asarray(
        jax.random.normal(k_mean, (OBS_DIM,), jnp.float32))
    obsnorm_stdev = np.abs(np.asarray(
        jax.random.normal(k_std, (OBS_DIM,), jnp.float32))) + 0.5

    params, meta = prepare_policy(layer_params, out_layer_params, "tanh",
                                  obsnorm_mean, obsnorm_stdev)

    x = jax.random.normal(k_obs, (BATCH, OBS_DIM), jnp.float32)

    out = policy_forward(params, meta, x)
    out = jax.block_until_ready(out)

    # pure-JAX f32 reference (bf16 operands/outputs introduce a small delta)
    def ref(x):
        h = (x - obsnorm_mean) / (obsnorm_stdev + 1e-6)
        for name in sorted(layer_params.keys()):
            W = layer_params[name]["AffineLayer"]["W"]
            b = layer_params[name]["AffineLayer"]["b"].squeeze(0)
            h = jnp.tanh(h @ W + b)
        W = out_layer_params["AffineLayer"]["W"]
        b = out_layer_params["AffineLayer"]["b"].squeeze(0)
        return h @ W + b

    expected = np.asarray(ref(x))
    assert out.shape == (BATCH, ACT_DIM), out.shape
    assert out.dtype == jnp.float32
    np.testing.assert_allclose(np.asarray(out), expected, rtol=5e-2, atol=5e-2)
    print("KERNEL_OK")
</pallas_src>

<mosaic_0001>
module attributes {stable_mosaic.version = 11 : i64} {
  func.func @kernel(%arg0: i32, %arg1: memref<16x32xbf16, #tpu.memory_space<vmem>>, %arg2: memref<32x128xbf16, #tpu.memory_space<vmem>>, %arg3: memref<1x128xf32, #tpu.memory_space<vmem>>, %arg4: memref<128x128xbf16, #tpu.memory_space<vmem>>, %arg5: memref<1x128xf32, #tpu.memory_space<vmem>>, %arg6: memref<128x128xbf16, #tpu.memory_space<vmem>>, %arg7: memref<1x128xf32, #tpu.memory_space<vmem>>, %arg8: memref<16x128xbf16, #tpu.memory_space<vmem>>) attributes {dimension_semantics = [#tpu.dimension_semantics<parallel>], iteration_bounds = array<i64: 1>, scalar_prefetch = 0 : i64, scratch_operands = 0 : i64, tpu.core_type = #tpu.core_type<tc>, window_params = [{transform_indices = @transform_0, window_bounds = array<i64: 16, 32>}, {pipeline_mode = #tpu.pipeline_mode<synchronous>, transform_indices = @transform_1, window_bounds = array<i64: 32, 128>}, {pipeline_mode = #tpu.pipeline_mode<synchronous>, transform_indices = @transform_2, window_bounds = array<i64: 1, 128>}, {pipeline_mode = #tpu.pipeline_mode<synchronous>, transform_indices = @transform_3, window_bounds = array<i64: 128, 128>}, {pipeline_mode = #tpu.pipeline_mode<synchronous>, transform_indices = @transform_4, window_bounds = array<i64: 1, 128>}, {pipeline_mode = #tpu.pipeline_mode<synchronous>, transform_indices = @transform_5, window_bounds = array<i64: 128, 128>}, {pipeline_mode = #tpu.pipeline_mode<synchronous>, transform_indices = @transform_6, window_bounds = array<i64: 1, 128>}, {transform_indices = @transform_7, window_bounds = array<i64: 16, 128>}]} {
    %c0 = arith.constant 0 : index
    %c0_0 = arith.constant 0 : index
    %0 = vector.load %arg1[%c0, %c0_0] : memref<16x32xbf16, #tpu.memory_space<vmem>>, vector<16x32xbf16>
    %c0_1 = arith.constant 0 : index
    %c0_2 = arith.constant 0 : index
    %1 = vector.load %arg2[%c0_1, %c0_2] : memref<32x128xbf16, #tpu.memory_space<vmem>>, vector<32x128xbf16>
    %c0_3 = arith.constant 0 : index
    %c0_4 = arith.constant 0 : index
    %2 = vector.load %arg3[%c0_3, %c0_4] : memref<1x128xf32, #tpu.memory_space<vmem>>, vector<1x128xf32>
    %cst = arith.constant dense<0.000000e+00> : vector<16x128xf32>
    %3 = tpu.matmul %0, %1, %cst {dimension_numbers = #tpu.dot_dimension_numbers<[1], [0], [0], [1], [0, 0, 1, 1], [], []>} : vector<16x32xbf16>, vector<32x128xbf16>, vector<16x128xf32> -> vector<16x128xf32>
    %4 = vector.broadcast %2 : vector<1x128xf32> to vector<16x128xf32>
    %5 = arith.addf %3, %4 : vector<16x128xf32>
    %6 = math.tanh %5 : vector<16x128xf32>
    %7 = arith.truncf %6 : vector<16x128xf32> to vector<16x128xbf16>
    %c0_5 = arith.constant 0 : index
    %c0_6 = arith.constant 0 : index
    %8 = vector.load %arg4[%c0_5, %c0_6] : memref<128x128xbf16, #tpu.memory_space<vmem>>, vector<128x128xbf16>
    %c0_7 = arith.constant 0 : index
    %c0_8 = arith.constant 0 : index
    %9 = vector.load %arg5[%c0_7, %c0_8] : memref<1x128xf32, #tpu.memory_space<vmem>>, vector<1x128xf32>
    %cst_9 = arith.constant dense<0.000000e+00> : vector<16x128xf32>
    %10 = tpu.matmul %7, %8, %cst_9 {dimension_numbers = #tpu.dot_dimension_numbers<[1], [0], [0], [1], [0, 0, 1, 1], [], []>} : vector<16x128xbf16>, vector<128x128xbf16>, vector<16x128xf32> -> vector<16x128xf32>
    %11 = vector.broadcast %9 : vector<1x128xf32> to vector<16x128xf32>
    %12 = arith.addf %10, %11 : vector<16x128xf32>
    %13 = math.tanh %12 : vector<16x128xf32>
    %14 = arith.truncf %13 : vector<16x128xf32> to vector<16x128xbf16>
    %c0_10 = arith.constant 0 : index
    %c0_11 = arith.constant 0 : index
    %15 = vector.load %arg6[%c0_10, %c0_11] : memref<128x128xbf16, #tpu.memory_space<vmem>>, vector<128x128xbf16>
    %c0_12 = arith.constant 0 : index
    %c0_13 = arith.constant 0 : index
    %16 = vector.load %arg7[%c0_12, %c0_13] : memref<1x128xf32, #tpu.memory_space<vmem>>, vector<1x128xf32>
    %cst_14 = arith.constant dense<0.000000e+00> : vector<16x128xf32>
    %17 = tpu.matmul %14, %15, %cst_14 {dimension_numbers = #tpu.dot_dimension_numbers<[1], [0], [0], [1], [0, 0, 1, 1], [], []>} : vector<16x128xbf16>, vector<128x128xbf16>, vector<16x128xf32> -> vector<16x128xf32>
    %18 = vector.broadcast %16 : vector<1x128xf32> to vector<16x128xf32>
    %19 = arith.addf %17, %18 : vector<16x128xf32>
    %20 = arith.truncf %19 : vector<16x128xf32> to vector<16x128xbf16>
    %c0_15 = arith.constant 0 : index
    %c0_16 = arith.constant 0 : index
    %21 = vector.load %arg8[%c0_15, %c0_16] : memref<16x128xbf16, #tpu.memory_space<vmem>>, vector<16x128xbf16>
    tpu.vector_store %arg8[%c0_15, %c0_16], %20 {strides = array<i32>} : memref<16x128xbf16, #tpu.memory_space<vmem>>, vector<16x128xbf16>,
    return
  }
  func.func @transform_0(%arg0: i32) -> (i32, i32) {
    %c0_i32 = arith.constant 0 : i32
    %c0_i32_0 = arith.constant 0 : i32
    return %arg0, %c0_i32 : i32, i32
  }
  func.func @transform_1(%arg0: i32) -> (i32, i32) {
    %c0_i32 = arith.constant 0 : i32
    %c0_i32_0 = arith.constant 0 : i32
    %c0_i32_1 = arith.constant 0 : i32
    return %c0_i32, %c0_i32_0 : i32, i32
  }
  func.func @transform_2(%arg0: i32) -> (i32, i32) {
    %c0_i32 = arith.constant 0 : i32
    %c0_i32_0 = arith.constant 0 : i32
    %c0_i32_1 = arith.constant 0 : i32
    return %c0_i32, %c0_i32_0 : i32, i32
  }
  func.func @transform_3(%arg0: i32) -> (i32, i32) {
    %c0_i32 = arith.constant 0 : i32
    %c0_i32_0 = arith.constant 0 : i32
    %c0_i32_1 = arith.constant 0 : i32
    return %c0_i32, %c0_i32_0 : i32, i32
  }
  func.func @transform_4(%arg0: i32) -> (i32, i32) {
    %c0_i32 = arith.constant 0 : i32
    %c0_i32_0 = arith.constant 0 : i32
    %c0_i32_1 = arith.constant 0 : i32
    return %c0_i32, %c0_i32_0 : i32, i32
  }
  func.func @transform_5(%arg0: i32) -> (i32, i32) {
    %c0_i32 = arith.constant 0 : i32
    %c0_i32_0 = arith.constant 0 : i32
    %c0_i32_1 = arith.constant 0 : i32
    return %c0_i32, %c0_i32_0 : i32, i32
  }
  func.func @transform_6(%arg0: i32) -> (i32, i32) {
    %c0_i32 = arith.constant 0 : i32
    %c0_i32_0 = arith.constant 0 : i32
    %c0_i32_1 = arith.constant 0 : i32
    return %c0_i32, %c0_i32_0 : i32, i32
  }
  func.func @transform_7(%arg0: i32) -> (i32, i32) {
    %c0_i32 = arith.constant 0 : i32
    %c0_i32_0 = arith.constant 0 : i32
    return %arg0, %c0_i32 : i32, i32
  }
}

</mosaic_0001>

<llo_original>
// kernel: tpu_custom_call.1
$region0: #{tpu_custom_call.1}
  #allocation0 [shape = 'u32[]', space=smem, size = 0x4, offset = 0x4, fixed_abs, tag = 'smem constant byte address 0x4 - core index']
  #allocation1 [shape = 'u32[144,128]{1,0:T(1,128)}', space=vmem, size = 0x12000, scoped, tag = 'internal scratch']
  %s0 = inlined_call_operand.hbm [shape: bf16[16,32], index: 0, kind: input, shape index: {}]
  %s1 = inlined_call_operand.hbm [shape: bf16[32,128], index: 1, kind: input, shape index: {}]
  %s2 = inlined_call_operand.vmem [shape: f32[1,128], index: 2, kind: input, shape index: {}]
  %s3 = inlined_call_operand.hbm [shape: bf16[128,128], index: 3, kind: input, shape index: {}]
  %s4 = inlined_call_operand.vmem [shape: f32[1,128], index: 4, kind: input, shape index: {}]
  %s5 = inlined_call_operand.hbm [shape: bf16[128,128], index: 5, kind: input, shape index: {}]
  %s6 = inlined_call_operand.vmem [shape: f32[1,128], index: 6, kind: input, shape index: {}]
  %s7 = inlined_call_operand.hbm [shape: bf16[16,128], index: 7, kind: output, shape index: {}]
  %s8 = sld [smem:[#allocation0]]
  $region54: #{tpu_custom_call.1} parent=0
    _
  %s10 = ssub.s32 1, %s8
  %s11 = scalar_select 0, %s10, %s8
  $region1: #{tpu_custom_call.1} parent=0
    #allocation2 [shape = 'u8[4096]{0}', space=vmem, size = 0x1000, scoped, tag = 'input window, operand 0, single buffered']
    #allocation3 [shape = 's32[1]{0}', space=sflag, size = 0x4, scoped, tag = 'scoped memory for tpu_custom_call.1']
    #allocation4 [shape = 's32[1]{0}', space=sflag, size = 0x4, scoped, tag = 'scoped memory for tpu_custom_call.1']
    #allocation5 [shape = 'u8[8192]{0}', space=vmem, size = 0x2000, scoped, tag = 'input window, operand 1, single buffered']
    #allocation6 [shape = 's32[1]{0}', space=sflag, size = 0x4, scoped, tag = 'scoped memory for tpu_custom_call.1']
    #allocation7 [shape = 'u8[32768]{0}', space=vmem, size = 0x8000, scoped, tag = 'input window, operand 3, single buffered']
    #allocation8 [shape = 'u8[32768]{0}', space=vmem, size = 0x8000, scoped, tag = 'input window, operand 5, single buffered']
    #allocation9 [shape = 's32[1]{0}', space=sflag, size = 0x4, scoped, tag = 'scoped memory for tpu_custom_call.1']
    #allocation10 [shape = 'u8[4096]{0}', space=vmem, size = 0x1000, scoped, tag = 'output window, operand 0, single buffered']
    %12 = vsyncpa [#allocation3], 0
    %13 = vsyncpa [#allocation6], 0
    %14 = vsyncpa [#allocation9], 0
    %15 = vsyncpa [#allocation4], 0
    // Predicated region
    $region2: #{tpu_custom_call.1} parent=1 // pred_check
      _
    $region3: #{tpu_custom_call.1} parent=1 // pred_check_branch
      %17 = sbr.rel (0) target = $region5
    $region4: #{tpu_custom_call.1} parent=1 // pred_region
      %s19 = ssub.s32 128, 128
      %20 = vsyncadd [#allocation3], %s19
      %s21 = sshll.u32 [#allocation2], 4
      %s22 = int_to_ptr.vmem [resolvable:$true] %s21
      %27 = dma.hbm_to_vmem [thread:$0]  %s0, 128, %s22, [#allocation3], 64, 64, 4
    $region5: #{tpu_custom_call.1} parent=1 // pred_fallthru
      _
    // Predicated region
    $region6: #{tpu_custom_call.1} parent=1 // pred_check
      _
    $region7: #{tpu_custom_call.1} parent=1 // pred_check_branch
      %29 = sbr.rel (0) target = $region9
    $region8: #{tpu_custom_call.1} parent=1 // pred_region
      %s31 = ssub.s32 256, 256
      %32 = vsyncadd [#allocation6], %s31
      %s33 = sshll.u32 [#allocation5], 4
      %s34 = int_to_ptr.vmem [resolvable:$true] %s33
      %39 = dma.hbm_to_vmem [thread:$0]  %s1, 256, %s34, [#allocation6], 64, 64, 4
    $region9: #{tpu_custom_call.1} parent=1 // pred_fallthru
      _
    // Predicated region
    $region10: #{tpu_custom_call.1} parent=1 // pred_check
      _
    $region11: #{tpu_custom_call.1} parent=1 // pred_check_branch
      %41 = sbr.rel (0) target = $region13
    $region12: #{tpu_custom_call.1} parent=1 // pred_region
      _
    $region13: #{tpu_custom_call.1} parent=1 // pred_fallthru
      _
    // Predicated region
    $region14: #{tpu_custom_call.1} parent=1 // pred_check
      _
    $region15: #{tpu_custom_call.1} parent=1 // pred_check_branch
      %43 = sbr.rel (0) target = $region17
    $region16: #{tpu_custom_call.1} parent=1 // pred_region
      %s45 = ssub.s32 1024, 1024
      %46 = vsyncadd [#allocation6], %s45
      %s47 = sshll.u32 [#allocation7], 4
      %s48 = int_to_ptr.vmem [resolvable:$true] %s47
      %53 = dma.hbm_to_vmem [thread:$0]  %s3, 1024, %s48, [#allocation6], 64, 64, 4
    $region17: #{tpu_custom_call.1} parent=1 // pred_fallthru
      _
    // Predicated region
    $region18: #{tpu_custom_call.1} parent=1 // pred_check
      _
    $region19: #{tpu_custom_call.1} parent=1 // pred_check_branch
      %55 = sbr.rel (0) target = $region21
    $region20: #{tpu_custom_call.1} parent=1 // pred_region
      _
    $region21: #{tpu_custom_call.1} parent=1 // pred_fallthru
      _
    // Predicated region
    $region22: #{tpu_custom_call.1} parent=1 // pred_check
      _
    $region23: #{tpu_custom_call.1} parent=1 // pred_check_branch
      %57 = sbr.rel (0) target = $region25
    $region24: #{tpu_custom_call.1} parent=1 // pred_region
      %s59 = ssub.s32 1024, 1024
      %60 = vsyncadd [#allocation9], %s59
      %s61 = sshll.u32 [#allocation8], 4
      %s62 = int_to_ptr.vmem [resolvable:$true] %s61
      %67 = dma.hbm_to_vmem [thread:$0]  %s5, 1024, %s62, [#allocation9], 64, 64, 4
    $region25: #{tpu_custom_call.1} parent=1 // pred_fallthru
      _
    // Predicated region
    $region26: #{tpu_custom_call.1} parent=1 // pred_check
      _
    $region27: #{tpu_custom_call.1} parent=1 // pred_check_branch
      %69 = sbr.rel (0) target = $region29
    $region28: #{tpu_custom_call.1} parent=1 // pred_region
      _
    $region29: #{tpu_custom_call.1} parent=1 // pred_fallthru
      _
    // Predicated region
    $region30: #{tpu_custom_call.1} parent=1 // pred_check
      _
    $region31: #{tpu_custom_call.1} parent=1 // pred_check_branch
      %71 = sbr.rel (0) target = $region33
    $region32: #{tpu_custom_call.1} parent=1 // pred_region
      %72 = dma.done [#allocation3], 128
    $region33: #{tpu_custom_call.1} parent=1 // pred_fallthru
      _
    // Predicated region
    $region34: #{tpu_custom_call.1} parent=1 // pred_check
      _
    $region35: #{tpu_custom_call.1} parent=1 // pred_check_branch
      %74 = sbr.rel (0) target = $region37
    $region36: #{tpu_custom_call.1} parent=1 // pred_region
      %75 = dma.done [#allocation6], 256
    $region37: #{tpu_custom_call.1} parent=1 // pred_fallthru
      _
    // Predicated region
    $region38: #{tpu_custom_call.1} parent=1 // pred_check
      _
    $region39: #{tpu_custom_call.1} parent=1 // pred_check_branch
      %77 = sbr.rel (0) target = $region41
    $region40: #{tpu_custom_call.1} parent=1 // pred_region
      %78 = dma.done [#allocation6], 1024
    $region41: #{tpu_custom_call.1} parent=1 // pred_fallthru
      _
    // Predicated region
    $region42: #{tpu_custom_call.1} parent=1 // pred_check
      _
    $region43: #{tpu_custom_call.1} parent=1 // pred_check_branch
      %80 = sbr.rel (0) target = $region45
    $region44: #{tpu_custom_call.1} parent=1 // pred_region
      %81 = dma.done [#allocation9], 1024
    $region45: #{tpu_custom_call.1} parent=1 // pred_fallthru
      _
    %v83 = vld [vmem:[#allocation2] sm:$0xf]
    %v84 = vld [vmem:[#allocation2 + $0x4] sm:$0xf]
    %v85 = vld [vmem:[#allocation5] sm:$0xf]
    %v86 = vld [vmem:[#allocation5 + $0x4] sm:$0xf]
    %v87 = vld [vmem:[#allocation5 + $0x8] sm:$0xf]
    %v88 = vld [vmem:[#allocation5 + $0xc] sm:$0xf]
    %v89 = vld [vmem:[%s2] sm:$0x1]
    %v91 = vlaneseq
    %v92 = vshrl.u32 %v91, 7
    %v93 = vsub.s32 0, %v92
    %v94 = vrot.slane %v89, %v93
    %v98 = vunpack.c.l.b16 %v83
    %v99 = vunpack.c.l.b16 %v84
    %v100 = vpack.c.b16 %v99, %v98
    %v105 = vunpack.c.l.b16 %v85
    %v106 = vunpack.c.l.b16 %v86
    %v107 = vunpack.c.l.b16 %v87
    %v108 = vunpack.c.l.b16 %v88
    %v109 = vpack.c.b16 %v106, %v105
    %v110 = vpack.c.b16 %v108, %v107
    %vm113 = vcmask 261120
    %v115 = vsel %vm113, %v100, 0
    %117 = vmatprep.subr.bf16.mxu0 0
    %118 = vmatpush1.bf16.msra.mxu0 %v109
    %119 = vmatprep.subr.bf16.mxu0 0
    %120 = vmatpush1.bf16.msra.mxu0 %v110
    %121 = vmatprep.subr.bf16.mxu0 0
    %122 = vmatpush1.bf16.msra.mxu0 0
    %123 = vmatprep.subr.bf16.mxu0 0
    %124 = vmatpush1.bf16.msra.mxu0 0
    %125 = vmatprep.subr.bf16.mxu0 0
    %126 = vmatpush1.bf16.msra.mxu0 0
    %127 = vmatprep.subr.bf16.mxu0 0
    %128 = vmatpush1.bf16.msra.mxu0 0
    %129 = vmatprep.subr.bf16.mxu0 0
    %130 = vmatpush1.bf16.msra.mxu0 0
    %131 = vmatprep.subr.bf16.mxu0 0
    %132 = vmatpush1.bf16.msra.mxu0 0
    %133 = vmatprep.subr.bf16.mxu0 0
    %134 = vmatpush1.bf16.msra.mxu0 0
    %135 = vmatprep.subr.bf16.mxu0 0
    %136 = vmatpush1.bf16.msra.mxu0 0
    %137 = vmatprep.subr.bf16.mxu0 0
    %138 = vmatpush1.bf16.msra.mxu0 0
    %139 = vmatprep.subr.bf16.mxu0 0
    %140 = vmatpush1.bf16.msra.mxu0 0
    %141 = vmatprep.subr.bf16.mxu0 0
    %142 = vmatpush1.bf16.msra.mxu0 0
    %143 = vmatprep.subr.bf16.mxu0 0
    %144 = vmatpush1.bf16.msra.mxu0 0
    %145 = vmatprep.subr.bf16.mxu0 0
    %146 = vmatpush1.bf16.msra.mxu0 0
    %147 = vmatprep.subr.bf16.mxu0 0
    %148 = vmatpush1.bf16.msra.mxu0 0
    %149 = vmatprep.mubr.bf16.mxu0 0
    %150 = vmatmul.mubr.bf16.gmra.mrb[0].mxu0 %v115
    %v151 = vpop.f32.mrb[0].mxu0
    %v152 = vadd.f32 %v94, %v151
    %v153 = vpop.f32.mrb[0].mxu0
    %v154 = vpop.f32.mrb[0].mxu0
    %v155 = vadd.f32 %v94, %v154
    %v156 = vpop.f32.mrb[0].mxu0
    %157 = vdwg.mxu0
    %v158 = vtanh.pop %v152
    %v159 = vtanh.pop %v155
    %v160 = vpack.c.bf16 %v159, %v158
    %v161 = vld [vmem:[#allocation7] sm:$0xf]
    %v162 = vld [vmem:[#allocation7 + $0x4] sm:$0xf]
    %v163 = vld [vmem:[#allocation7 + $0x8] sm:$0xf]
    %v164 = vld [vmem:[#allocation7 + $0xc] sm:$0xf]
    %v165 = vld [vmem:[#allocation7 + $0x10] sm:$0xf]
    %v166 = vld [vmem:[#allocation7 + $0x14] sm:$0xf]
    %v167 = vld [vmem:[#allocation7 + $0x18] sm:$0xf]
    %v168 = vld [vmem:[#allocation7 + $0x1c] sm:$0xf]
    %v169 = vld [vmem:[#allocation7 + $0x20] sm:$0xf]
    %v170 = vld [vmem:[#allocation7 + $0x24] sm:$0xf]
    %v171 = vld [vmem:[#allocation7 + $0x28] sm:$0xf]
    %v172 = vld [vmem:[#allocation7 + $0x2c] sm:$0xf]
    %v173 = vld [vmem:[#allocation7 + $0x30] sm:$0xf]
    %v174 = vld [vmem:[#allocation7 + $0x34] sm:$0xf]
    %v175 = vld [vmem:[#allocation7 + $0x38] sm:$0xf]
    %v176 = vld [vmem:[#allocation7 + $0x3c] sm:$0xf]
    %v177 = vld [vmem:[%s4] sm:$0x1]
    %v179 = vlaneseq
    %v180 = vshrl.u32 %v179, 7
    %v181 = vsub.s32 0, %v180
    %v182 = vrot.slane %v177, %v181
    %v200 = vunpack.c.l.b16 %v161
    %v201 = vunpack.c.l.b16 %v162
    %v202 = vunpack.c.l.b16 %v163
    %v203 = vunpack.c.l.b16 %v164
    %v204 = vunpack.c.l.b16 %v165
    %v205 = vunpack.c.l.b16 %v166
    %v206 = vunpack.c.l.b16 %v167
    %v207 = vunpack.c.l.b16 %v168
    %v208 = vunpack.c.l.b16 %v169
    %v209 = vunpack.c.l.b16 %v170
    %v210 = vunpack.c.l.b16 %v171
    %v211 = vunpack.c.l.b16 %v172
    %v212 = vunpack.c.l.b16 %v173
    %v213 = vunpack.c.l.b16 %v174
    %v214 = vunpack.c.l.b16 %v175
    %v215 = vunpack.c.l.b16 %v176
    %v216 = vpack.c.b16 %v201, %v200
    %v217 = vpack.c.b16 %v203, %v202
    %v218 = vpack.c.b16 %v205, %v204
    %v219 = vpack.c.b16 %v207, %v206
    %v220 = vpack.c.b16 %v209, %v208
    %v221 = vpack.c.b16 %v211, %v210
    %v222 = vpack.c.b16 %v213, %v212
    %v223 = vpack.c.b16 %v215, %v214
    %232 = vmatprep.subr.bf16.mxu0 0
    %233 = vmatpush1.bf16.msra.mxu0 %v216
    %234 = vmatprep.subr.bf16.mxu0 0
    %235 = vmatpush1.bf16.msra.mxu0 %v217
    %236 = vmatprep.subr.bf16.mxu0 0
    %237 = vmatpush1.bf16.msra.mxu0 %v218
    %238 = vmatprep.subr.bf16.mxu0 0
    %239 = vmatpush1.bf16.msra.mxu0 %v219
    %240 = vmatprep.subr.bf16.mxu0 0
    %241 = vmatpush1.bf16.msra.mxu0 %v220
    %242 = vmatprep.subr.bf16.mxu0 0
    %243 = vmatpush1.bf16.msra.mxu0 %v221
    %244 = vmatprep.subr.bf16.mxu0 0
    %245 = vmatpush1.bf16.msra.mxu0 %v222
    %246 = vmatprep.subr.bf16.mxu0 0
    %247 = vmatpush1.bf16.msra.mxu0 %v223
    %248 = vmatprep.subr.bf16.mxu0 0
    %249 = vmatpush1.bf16.msra.mxu0 0
    %250 = vmatprep.subr.bf16.mxu0 0
    %251 = vmatpush1.bf16.msra.mxu0 0
    %252 = vmatprep.subr.bf16.mxu0 0
    %253 = vmatpush1.bf16.msra.mxu0 0
    %254 = vmatprep.subr.bf16.mxu0 0
    %255 = vmatpush1.bf16.msra.mxu0 0
    %256 = vmatprep.subr.bf16.mxu0 0
    %257 = vmatpush1.bf16.msra.mxu0 0
    %258 = vmatprep.subr.bf16.mxu0 0
    %259 = vmatpush1.bf16.msra.mxu0 0
    %260 = vmatprep.subr.bf16.mxu0 0
    %261 = vmatpush1.bf16.msra.mxu0 0
    %262 = vmatprep.subr.bf16.mxu0 0
    %263 = vmatpush1.bf16.msra.mxu0 0
    %264 = vmatprep.mubr.bf16.mxu0 0
    %265 = vmatmul.mubr.bf16.gmra.mrb[0].mxu0 %v160
    %v266 = vpop.f32.mrb[0].mxu0
    %v267 = vadd.f32 %v182, %v266
    %v268 = vpop.f32.mrb[0].mxu0
    %v269 = vpop.f32.mrb[0].mxu0
    %v270 = vadd.f32 %v182, %v269
    %v271 = vpop.f32.mrb[0].mxu0
    %272 = vdwg.mxu0
    %v273 = vtanh.pop %v267
    %v274 = vtanh.pop %v270
    %v275 = vpack.c.bf16 %v274, %v273
    %v276 = vld [vmem:[#allocation8] sm:$0xf]
    %v277 = vld [vmem:[#allocation8 + $0x4] sm:$0xf]
    %v278 = vld [vmem:[#allocation8 + $0x8] sm:$0xf]
    %v279 = vld [vmem:[#allocation8 + $0xc] sm:$0xf]
    %v280 = vld [vmem:[#allocation8 + $0x10] sm:$0xf]
    %v281 = vld [vmem:[#allocation8 + $0x14] sm:$0xf]
    %v282 = vld [vmem:[#allocation8 + $0x18] sm:$0xf]
    %v283 = vld [vmem:[#allocation8 + $0x1c] sm:$0xf]
    %v284 = vld [vmem:[#allocation8 + $0x20] sm:$0xf]
    %v285 = vld [vmem:[#allocation8 + $0x24] sm:$0xf]
    %v286 = vld [vmem:[#allocation8 + $0x28] sm:$0xf]
    %v287 = vld [vmem:[#allocation8 + $0x2c] sm:$0xf]
    %v288 = vld [vmem:[#allocation8 + $0x30] sm:$0xf]
    %v289 = vld [vmem:[#allocation8 + $0x34] sm:$0xf]
    %v290 = vld [vmem:[#allocation8 + $0x38] sm:$0xf]
    %v291 = vld [vmem:[#allocation8 + $0x3c] sm:$0xf]
    %v292 = vld [vmem:[%s6] sm:$0x1]
    %v294 = vlaneseq
    %v295 = vshrl.u32 %v294, 7
    %v296 = vsub.s32 0, %v295
    %v297 = vrot.slane %v292, %v296
    %v315 = vunpack.c.l.b16 %v276
    %v316 = vunpack.c.l.b16 %v277
    %v317 = vunpack.c.l.b16 %v278
    %v318 = vunpack.c.l.b16 %v279
    %v319 = vunpack.c.l.b16 %v280
    %v320 = vunpack.c.l.b16 %v281
    %v321 = vunpack.c.l.b16 %v282
    %v322 = vunpack.c.l.b16 %v283
    %v323 = vunpack.c.l.b16 %v284
    %v324 = vunpack.c.l.b16 %v285
    %v325 = vunpack.c.l.b16 %v286
    %v326 = vunpack.c.l.b16 %v287
    %v327 = vunpack.c.l.b16 %v288
    %v328 = vunpack.c.l.b16 %v289
    %v329 = vunpack.c.l.b16 %v290
    %v330 = vunpack.c.l.b16 %v291
    %v331 = vpack.c.b16 %v316, %v315
    %v332 = vpack.c.b16 %v318, %v317
    %v333 = vpack.c.b16 %v320, %v319
    %v334 = vpack.c.b16 %v322, %v321
    %v335 = vpack.c.b16 %v324, %v323
    %v336 = vpack.c.b16 %v326, %v325
    %v337 = vpack.c.b16 %v328, %v327
    %v338 = vpack.c.b16 %v330, %v329
    %347 = vmatprep.subr.bf16.mxu0 0
    %348 = vmatpush1.bf16.msra.mxu0 %v331
    %349 = vmatprep.subr.bf16.mxu0 0
    %350 = vmatpush1.bf16.msra.mxu0 %v332
    %351 = vmatprep.subr.bf16.mxu0 0
    %352 = vmatpush1.bf16.msra.mxu0 %v333
    %353 = vmatprep.subr.bf16.mxu0 0
    %354 = vmatpush1.bf16.msra.mxu0 %v334
    %355 = vmatprep.subr.bf16.mxu0 0
    %356 = vmatpush1.bf16.msra.mxu0 %v335
    %357 = vmatprep.subr.bf16.mxu0 0
    %358 = vmatpush1.bf16.msra.mxu0 %v336
    %359 = vmatprep.subr.bf16.mxu0 0
    %360 = vmatpush1.bf16.msra.mxu0 %v337
    %361 = vmatprep.subr.bf16.mxu0 0
    %362 = vmatpush1.bf16.msra.mxu0 %v338
    %363 = vmatprep.subr.bf16.mxu0 0
    %364 = vmatpush1.bf16.msra.mxu0 0
    %365 = vmatprep.subr.bf16.mxu0 0
    %366 = vmatpush1.bf16.msra.mxu0 0
    %367 = vmatprep.subr.bf16.mxu0 0
    %368 = vmatpush1.bf16.msra.mxu0 0
    %369 = vmatprep.subr.bf16.mxu0 0
    %370 = vmatpush1.bf16.msra.mxu0 0
    %371 = vmatprep.subr.bf16.mxu0 0
    %372 = vmatpush1.bf16.msra.mxu0 0
    %373 = vmatprep.subr.bf16.mxu0 0
    %374 = vmatpush1.bf16.msra.mxu0 0
    %375 = vmatprep.subr.bf16.mxu0 0
    %376 = vmatpush1.bf16.msra.mxu0 0
    %377 = vmatprep.subr.bf16.mxu0 0
    %378 = vmatpush1.bf16.msra.mxu0 0
    %379 = vmatprep.mubr.bf16.mxu0 0
    %380 = vmatmul.mubr.bf16.gmra.mrb[0].mxu0 %v275
    %v381 = vpop.f32.mrb[0].mxu0
    %v382 = vadd.f32 %v297, %v381
    %v383 = vpop.f32.mrb[0].mxu0
    %v384 = vpop.f32.mrb[0].mxu0
    %v385 = vadd.f32 %v297, %v384
    %v386 = vpop.f32.mrb[0].mxu0
    %387 = vdwg.mxu0
    %v388 = vpack.c.bf16 %v385, %v382
    %v390 = vunpack.c.l.b16 %v388
    %v391 = vunpack.c.h.b16 %v388
    %v392 = vpack.c.b16 %v390, %v390
    %v393 = vpack.c.b16 %v391, %v391
    %396 = vst [vmem:[#allocation10] sm:$0xf] %v392
    %397 = vst [vmem:[#allocation10 + $0x4] sm:$0xf] %v393
    // Predicated region
    $region46: #{tpu_custom_call.1} parent=1 // pred_check
      _
    $region47: #{tpu_custom_call.1} parent=1 // pred_check_branch
      %399 = sbr.rel (0) target = $region49
    $region48: #{tpu_custom_call.1} parent=1 // pred_region
      %s401 = ssub.s32 128, 128
      %402 = vsyncadd [#allocation4], %s401
      %s403 = sshll.u32 [#allocation10], 4
      %s404 = int_to_ptr.vmem [resolvable:$true] %s403
      %409 = dma.vmem_to_hbm [thread:$0]  %s404, 128, %s7, [#allocation4], 64, 64, 4
    $region49: #{tpu_custom_call.1} parent=1 // pred_fallthru
      _
    // Predicated region
    $region50: #{tpu_custom_call.1} parent=1 // pred_check
      _
    $region51: #{tpu_custom_call.1} parent=1 // pred_check_branch
      %411 = sbr.rel (0) target = $region53
    $region52: #{tpu_custom_call.1} parent=1 // pred_region
      %412 = dma.done [#allocation4], 128
    $region53: #{tpu_custom_call.1} parent=1 // pred_fallthru
      _
    %413 = vsyncpa [#allocation3], 1
    %414 = vsyncpa [#allocation6], 1
    %415 = vsyncpa [#allocation9], 1
    %416 = vsyncpa [#allocation4], 1

</llo_original>
